<compile_context>
chip_gen: v5e
topology: v5e:2x2
jax: 0.10.0
libtpu: 0.0.40
codegen_flags: <defaults>
</compile_context>

<pallas_src>
import numpy as np
import jax
import jax.numpy as jnp
from jax.experimental import pallas as pl
from jax.experimental.pallas import tpu as pltpu


# ----------------------------------------------------------------------------
# Small helpers.
# ----------------------------------------------------------------------------
def _round_up(x, m):
    return ((x + m - 1) // m) * m


def _largest_divisor_leq(n, cap):
    for c in range(min(n, cap), 0, -1):
        if n % c == 0:
            return c
    return 1


def _vmem_capacity_bytes():
    cap = 64 << 20  # conservative default (v7x per-TC VMEM)
    try:
        info = pltpu.get_tpu_info()
        cap = int(getattr(info, "vmem_capacity_bytes", cap))
    except Exception:
        pass
    return cap


def _cparams(sem, vmem_limit):
    return pltpu.CompilerParams(dimension_semantics=sem,
                                vmem_limit_bytes=int(vmem_limit))


def _const_spec(shape, single_buffer):
    """BlockSpec for an operand that is identical at every grid step."""
    rank = len(shape)
    index_map = lambda *_: (0,) * rank
    if single_buffer:
        # grid-invariant block: double-buffering only wastes VMEM.
        return pl.BlockSpec(shape, index_map, pipeline_mode=pl.Buffered(1))
    return pl.BlockSpec(shape, index_map)


def _try_single_buffered(build_and_call):
    """Prefer Buffered(1) on grid-invariant operands; fall back if unsupported."""
    try:
        return build_and_call(True)
    except Exception:
        return build_and_call(False)


def _pick_proj_tiles(n_rows, d, vp, budget_bytes):
    """Row tile RT / vocab tile VT for the projection, sized to the VMEM budget."""
    vt = 128
    for cand in (2048, 1024, 512, 256, 128):
        if vp % cand == 0:
            vt = cand
            break

    def bytes_needed(rt, vt_):
        return (2 * rt * d * 2          # h tile (bf16, double buffered)
                + 2 * d * vt_ * 2       # W_out tile (bf16, double buffered)
                + 2 * vt_ * 4 * 2       # bias tile
                + 2 * rt * vt_ * 4      # output tile (f32, double buffered)
                + 4 * rt * 4)           # lse + running max/sum scratch

    rt = 512                            # ~85% of HBM roofline on v6e
    while rt > 8 and bytes_needed(rt, vt) > budget_bytes:
        rt //= 2
    rt = max(8, min(rt, _round_up(n_rows, 8)))
    rt = _round_up(rt, 8)
    return rt, vt


# ----------------------------------------------------------------------------
# Kernel A: time-parallel input-gate matmul  gi = X @ W_ih^T + b   (bf16 MXU).
# ----------------------------------------------------------------------------
def input_gates_kernel(x_ref, wih_ref, bi_ref, gi_ref):
    gi_ref[...] = (jnp.dot(x_ref[...], wih_ref[...],
                           preferred_element_type=jnp.float32) + bi_ref[...])


# ----------------------------------------------------------------------------
# Kernel B: sequential GRU recurrence over time chunks (gi streamed per chunk).
# ----------------------------------------------------------------------------
def gru_chunk_kernel(gi_ref, h0_ref, whh_ref, bhn_ref, h_out_ref, h_carry):
    tc, bp, three_d = gi_ref.shape
    d = three_d // 3

    @pl.when(pl.program_id(0) == 0)
    def _():
        h_carry[...] = h0_ref[...]

    whh = whh_ref[...]          # [d, 3d], hoisted out of the loop
    b_hn = bhn_ref[...]         # [1, d]  (scaled by r inside the n gate)

    def step(t, h_prev):
        g_i = gi_ref[t]                                                 # [Bp, 3d]
        gh = jnp.dot(h_prev, whh, preferred_element_type=jnp.float32)   # [Bp, 3d]
        i_r, i_z, i_n = g_i[:, 0:d], g_i[:, d:2 * d], g_i[:, 2 * d:3 * d]
        h_r, h_z, h_n = gh[:, 0:d], gh[:, d:2 * d], gh[:, 2 * d:3 * d]
        r = jax.nn.sigmoid(i_r + h_r)
        z = jax.nn.sigmoid(i_z + h_z)
        n = jnp.tanh(i_n + r * (h_n + b_hn))
        h_new = (1.0 - z) * n + z * h_prev
        h_out_ref[t] = h_new
        return h_new

    # Bounded unroll: keeps LLO visibility without blowing the 64-vreg budget.
    h_last = jax.lax.fori_loop(0, tc, step, h_carry[...], unroll=min(tc, 8))
    h_carry[...] = h_last


# ----------------------------------------------------------------------------
# Kernel C1: online log-sum-exp of the output logits, vocab axis tiled.
# ----------------------------------------------------------------------------
def lse_kernel(h_ref, w_ref, b_ref, lse_ref, m_sc, l_sc):
    v = pl.program_id(1)

    @pl.when(v == 0)
    def _():
        m_sc[...] = jnp.full_like(m_sc, -1e30)
        l_sc[...] = jnp.zeros_like(l_sc)

    logits = jnp.dot(h_ref[...], w_ref[...],
                     preferred_element_type=jnp.float32) + b_ref[...]
    m_prev = m_sc[...]
    m_new = jnp.maximum(m_prev, jnp.max(logits, axis=-1, keepdims=True))
    scale = jnp.exp(m_prev - m_new)
    l_sc[...] = scale * l_sc[...] + jnp.sum(jnp.exp(logits - m_new),
                                            axis=-1, keepdims=True)
    m_sc[...] = m_new

    @pl.when(v == pl.num_programs(1) - 1)
    def _():
        lse_ref[...] = m_sc[...] + jnp.log(l_sc[...])


# ----------------------------------------------------------------------------
# Kernel C2: normalized probabilities per (row, vocab) tile.
# ----------------------------------------------------------------------------
def prob_kernel(h_ref, w_ref, b_ref, lse_ref, out_ref):
    logits = jnp.dot(h_ref[...], w_ref[...],
                     preferred_element_type=jnp.float32) + b_ref[...]
    out_ref[...] = jnp.exp(logits - lse_ref[...]).astype(out_ref.dtype)


# ----------------------------------------------------------------------------
# Wrapper.
# ----------------------------------------------------------------------------
def decoder_forward(output_indices, input_indices, encoder_hiddens, params,
                    probs_dtype=jnp.float32):
    # `input_indices` is unused in the PyTorch forward; kept for signature parity.
    del input_indices
    emb, w_ih, w_hh, b_ih, b_hh, w_out, b_out = params

    B, T = output_indices.shape
    d = emb.shape[1]
    V = w_out.shape[0]

    Bp = _round_up(max(B, 8), 8)          # sublane-pad batch
    Vp = _round_up(V, 128)                # lane-pad vocab

    vmem_cap = _vmem_capacity_bytes()
    vmem_limit = max(32 << 20, int(vmem_cap * 0.75))

    # Embedding lookup (plain-JAX glue), time-major layout, batch padding.
    x = jnp.take(emb, output_indices, axis=0)             # [B, T, d]
    x_tm = jnp.transpose(x, (1, 0, 2))                    # [T, B, d]
    x_tm = jnp.pad(x_tm, ((0, 0), (0, Bp - B), (0, 0)))
    h0 = jnp.pad(encoder_hiddens[:, -1, :], ((0, Bp - B), (0, 0)))

    # Weight prep: transpose for row-major matmuls, pre-fuse r/z biases.
    wih_bf = w_ih.T.astype(jnp.bfloat16)                  # [d, 3d] bf16 (MXU fast path)
    whh_t = w_hh.T                                        # [d, 3d] f32 (tiny recurrence)
    b_i = jnp.concatenate(
        [b_ih[:2 * d] + b_hh[:2 * d], b_ih[2 * d:]]).reshape(1, 3 * d)
    b_hn = b_hh[2 * d:].reshape(1, d)

    # --- Kernel A: time-parallel input-gate matmul ---------------------------
    Nr = T * Bp
    x_rows = x_tm.reshape(Nr, d).astype(jnp.bfloat16)
    GR = _largest_divisor_leq(Nr, 256)

    def _call_gates(single_buffer):
        return pl.pallas_call(
            input_gates_kernel,
            out_shape=jax.ShapeDtypeStruct((Nr, 3 * d), jnp.float32),
            grid_spec=pltpu.PrefetchScalarGridSpec(
                num_scalar_prefetch=0,
                grid=(Nr // GR,),
                in_specs=[
                    pl.BlockSpec((GR, d), lambda i: (i, 0)),          # x rows
                    _const_spec((d, 3 * d), single_buffer),           # W_ih^T
                    _const_spec((1, 3 * d), single_buffer),           # fused bias
                ],
                out_specs=pl.BlockSpec((GR, 3 * d), lambda i: (i, 0)),
            ),
            compiler_params=_cparams(("parallel",), vmem_limit),
        )(x_rows, wih_bf, b_i)

    gi = _try_single_buffered(_call_gates).reshape(T, Bp, 3 * d)

    # --- Kernel B: GRU recurrence over streamed time chunks ------------------
    Tc = _largest_divisor_leq(T, 32)

    def _call_gru(single_buffer):
        return pl.pallas_call(
            gru_chunk_kernel,
            out_shape=jax.ShapeDtypeStruct((T, Bp, d), jnp.float32),
            grid_spec=pltpu.PrefetchScalarGridSpec(
                num_scalar_prefetch=0,
                grid=(T // Tc,),
                in_specs=[
                    pl.BlockSpec((Tc, Bp, 3 * d), lambda t: (t, 0, 0)),  # gi chunk
                    _const_spec((Bp, d), single_buffer),                 # h0
                    _const_spec((d, 3 * d), single_buffer),              # W_hh^T
                    _const_spec((1, d), single_buffer),                  # b_hn
                ],
                out_specs=pl.BlockSpec((Tc, Bp, d), lambda t: (t, 0, 0)),
                scratch_shapes=[pltpu.VMEM((Bp, d), jnp.float32)],       # h carry
            ),
            compiler_params=_cparams(("arbitrary",), vmem_limit),        # sequential
        )(gi, h0, whh_t, b_hn)

    h_all = _try_single_buffered(_call_gru)                # [T, Bp, d]

    # --- Projection + softmax: vocab-tiled online LSE, then normalized probs.
    # Re-lay out the SMALL hidden tensor batch-major so the BIG probability
    # tensor comes out directly in [B, T, V] row order (no big transpose).
    h_bm = jnp.transpose(h_all, (1, 0, 2)).reshape(Nr, d)  # row = b*T + t

    RT, VT = _pick_proj_tiles(Nr, d, Vp, int(vmem_limit * 0.8))
    Np = _round_up(Nr, RT)
    if Np != Nr:
        h_bm = jnp.pad(h_bm, ((0, Np - Nr), (0, 0)))
    h_bf = h_bm.astype(jnp.bfloat16)

    wout_bf = jnp.pad(w_out.T, ((0, 0), (0, Vp - V))).astype(jnp.bfloat16)
    # Padded columns get bias -1e30 so exp(logit - lse) underflows to exactly 0
    # (bias stays f32; it is added after the f32 accumulation).
    bout_p = jnp.pad(b_out, (0, Vp - V),
                     constant_values=-1e30).reshape(1, Vp).astype(jnp.float32)

    nR, nV = Np // RT, Vp // VT

    lse = pl.pallas_call(
        lse_kernel,
        out_shape=jax.ShapeDtypeStruct((Np, 1), jnp.float32),
        grid_spec=pltpu.PrefetchScalarGridSpec(
            num_scalar_prefetch=0,
            grid=(nR, nV),
            in_specs=[
                pl.BlockSpec((RT, d), lambda r, v: (r, 0)),   # hidden rows
                pl.BlockSpec((d, VT), lambda r, v: (0, v)),   # W_out^T tile
                pl.BlockSpec((1, VT), lambda r, v: (0, v)),   # bias tile
            ],
            out_specs=pl.BlockSpec((RT, 1), lambda r, v: (r, 0)),
            scratch_shapes=[pltpu.VMEM((RT, 1), jnp.float32),   # running max
                            pltpu.VMEM((RT, 1), jnp.float32)],  # running sum
        ),
        compiler_params=_cparams(("parallel", "arbitrary"), vmem_limit),
    )(h_bf, wout_bf, bout_p)

    probs = pl.pallas_call(
        prob_kernel,
        out_shape=jax.ShapeDtypeStruct((Np, Vp), probs_dtype),
        grid_spec=pltpu.PrefetchScalarGridSpec(
            num_scalar_prefetch=0,
            grid=(nR, nV),
            in_specs=[
                pl.BlockSpec((RT, d), lambda r, v: (r, 0)),
                pl.BlockSpec((d, VT), lambda r, v: (0, v)),
                pl.BlockSpec((1, VT), lambda r, v: (0, v)),
                pl.BlockSpec((RT, 1), lambda r, v: (r, 0)),   # lse rows
            ],
            out_specs=pl.BlockSpec((RT, VT), lambda r, v: (r, v)),
        ),
        compiler_params=_cparams(("parallel", "parallel"), vmem_limit),
    )(h_bf, wout_bf, bout_p, lse)

    # Rows are batch-major (row = b*T + t): reshape + un-pad, no big transpose.
    probs = probs[:Nr].reshape(Bp, T, Vp)[:B, :, :V]
    return probs


# ----------------------------------------------------------------------------
# Pure-JAX reference (correctness check only).
# ----------------------------------------------------------------------------
def decoder_reference(output_indices, input_indices, encoder_hiddens, params):
    del input_indices
    emb, w_ih, w_hh, b_ih, b_hh, w_out, b_out = params
    d = emb.shape[1]
    x = jnp.take(emb, output_indices, axis=0)        # [B, T, d]
    h0 = encoder_hiddens[:, -1, :]                   # [B, d]

    def step(h, x_t):
        gi = x_t @ w_ih.T + b_ih
        gh = h @ w_hh.T + b_hh
        i_r, i_z, i_n = gi[:, :d], gi[:, d:2 * d], gi[:, 2 * d:]
        h_r, h_z, h_n = gh[:, :d], gh[:, d:2 * d], gh[:, 2 * d:]
        r = jax.nn.sigmoid(i_r + h_r)
        z = jax.nn.sigmoid(i_z + h_z)
        n = jnp.tanh(i_n + r * h_n)
        h_new = (1.0 - z) * n + z * h
        return h_new, h_new

    _, hs = jax.lax.scan(step, h0, jnp.transpose(x, (1, 0, 2)))  # [T, B, d]
    hs = jnp.transpose(hs, (1, 0, 2))                            # [B, T, d]
    logits = hs @ w_out.T + b_out
    return jax.nn.softmax(logits, axis=-1)


# ----------------------------------------------------------------------------
# Deterministic parameter init + demo run.
# ----------------------------------------------------------------------------
def init_params(key, vocab_size, d_model):
    ks = jax.random.split(key, 7)
    scale = 0.1
    emb = scale * jax.random.normal(ks[0], (vocab_size, d_model), jnp.float32)
    w_ih = scale * jax.random.normal(ks[1], (3 * d_model, d_model), jnp.float32)
    w_hh = scale * jax.random.normal(ks[2], (3 * d_model, d_model), jnp.float32)
    b_ih = scale * jax.random.normal(ks[3], (3 * d_model,), jnp.float32)
    b_hh = scale * jax.random.normal(ks[4], (3 * d_model,), jnp.float32)
    w_out = scale * jax.random.normal(ks[5], (vocab_size, d_model), jnp.float32)
    b_out = scale * jax.random.normal(ks[6], (vocab_size,), jnp.float32)
    return (emb, w_ih, w_hh, b_ih, b_hh, w_out, b_out)


if __name__ == "__main__":
    B = 2              # batch_size
    T_out = 8          # output_seq_len
    T_in = 8           # input_seq_len
    d_model = 32
    vocab_size = 64

    key = jax.random.PRNGKey(0)
    k_par, k_out, k_in, k_enc = jax.random.split(key, 4)

    params = init_params(k_par, vocab_size, d_model)
    output_indices = jax.random.randint(k_out, (B, T_out), 0, vocab_size, jnp.int32)
    input_indices = jax.random.randint(k_in, (B, T_in), 0, vocab_size, jnp.int32)
    encoder_hiddens = jax.random.normal(k_enc, (B, T_in, d_model), jnp.float32)

    out = decoder_forward(output_indices, input_indices, encoder_hiddens, params)
    out = jax.block_until_ready(out)

    ref = decoder_reference(output_indices, input_indices, encoder_hiddens, params)
    ref = jax.block_until_ready(ref)

    assert out.shape == (B, T_out, vocab_size), out.shape
    # Tolerance accounts for bf16 MXU operands in the input-gate and output
    # projection matmuls (accumulation and softmax math stay in f32).
    np.testing.assert_allclose(np.asarray(out), np.asarray(ref),
                               rtol=2e-2, atol=2e-4)

    print("KERNEL_OK")
</pallas_src>

<mosaic_0001>
module attributes {stable_mosaic.version = 11 : i64} {
  func.func @input_gates_kernel(%arg0: i32, %arg1: memref<64x32xbf16, #tpu.memory_space<vmem>>, %arg2: memref<32x96xbf16, #tpu.memory_space<vmem>>, %arg3: memref<1x96xf32, #tpu.memory_space<vmem>>, %arg4: memref<64x96xf32, #tpu.memory_space<vmem>>) attributes {dimension_semantics = [#tpu.dimension_semantics<parallel>], iteration_bounds = array<i64: 1>, scalar_prefetch = 0 : i64, scratch_operands = 0 : i64, tpu.core_type = #tpu.core_type<tc>, window_params = [{transform_indices = @transform_0, window_bounds = array<i64: 64, 32>}, {pipeline_mode = #tpu.pipeline_mode<synchronous>, transform_indices = @transform_1, window_bounds = array<i64: 32, 96>}, {pipeline_mode = #tpu.pipeline_mode<synchronous>, transform_indices = @transform_2, window_bounds = array<i64: 1, 96>}, {transform_indices = @transform_3, window_bounds = array<i64: 64, 96>}]} {
    %c0 = arith.constant 0 : index
    %c0_0 = arith.constant 0 : index
    %0 = vector.load %arg1[%c0, %c0_0] : memref<64x32xbf16, #tpu.memory_space<vmem>>, vector<64x32xbf16>
    %c0_1 = arith.constant 0 : index
    %c0_2 = arith.constant 0 : index
    %1 = vector.load %arg2[%c0_1, %c0_2] : memref<32x96xbf16, #tpu.memory_space<vmem>>, vector<32x96xbf16>
    %cst = arith.constant dense<0.000000e+00> : vector<64x96xf32>
    %2 = tpu.matmul %0, %1, %cst {dimension_numbers = #tpu.dot_dimension_numbers<[1], [0], [0], [1], [0, 0, 1, 1], [], []>} : vector<64x32xbf16>, vector<32x96xbf16>, vector<64x96xf32> -> vector<64x96xf32>
    %c0_3 = arith.constant 0 : index
    %c0_4 = arith.constant 0 : index
    %3 = vector.load %arg3[%c0_3, %c0_4] : memref<1x96xf32, #tpu.memory_space<vmem>>, vector<1x96xf32>
    %4 = vector.broadcast %3 : vector<1x96xf32> to vector<64x96xf32>
    %5 = arith.addf %2, %4 : vector<64x96xf32>
    %c0_5 = arith.constant 0 : index
    %c0_6 = arith.constant 0 : index
    %6 = vector.load %arg4[%c0_5, %c0_6] : memref<64x96xf32, #tpu.memory_space<vmem>>, vector<64x96xf32>
    tpu.vector_store %arg4[%c0_5, %c0_6], %5 {strides = array<i32>} : memref<64x96xf32, #tpu.memory_space<vmem>>, vector<64x96xf32>,
    return
  }
  func.func @transform_0(%arg0: i32) -> (i32, i32) {
    %c0_i32 = arith.constant 0 : i32
    %c0_i32_0 = arith.constant 0 : i32
    return %arg0, %c0_i32 : i32, i32
  }
  func.func @transform_1(%arg0: i32) -> (i32, i32) {
    %c0_i32 = arith.constant 0 : i32
    %c0_i32_0 = arith.constant 0 : i32
    %c0_i32_1 = arith.constant 0 : i32
    return %c0_i32, %c0_i32_0 : i32, i32
  }
  func.func @transform_2(%arg0: i32) -> (i32, i32) {
    %c0_i32 = arith.constant 0 : i32
    %c0_i32_0 = arith.constant 0 : i32
    %c0_i32_1 = arith.constant 0 : i32
    return %c0_i32, %c0_i32_0 : i32, i32
  }
  func.func @transform_3(%arg0: i32) -> (i32, i32) {
    %c0_i32 = arith.constant 0 : i32
    %c0_i32_0 = arith.constant 0 : i32
    return %arg0, %c0_i32 : i32, i32
  }
}

module attributes {stable_mosaic.version = 11 : i64} {
  func.func @input_gates_kernel(%arg0: i32, %arg1: memref<64x32xbf16, #tpu.memory_space<vmem>>, %arg2: memref<32x96xbf16, #tpu.memory_space<vmem>>, %arg3: memref<1x96xf32, #tpu.memory_space<vmem>>, %arg4: memref<64x96xf32, #tpu.memory_space<vmem>>) attributes {dimension_semantics = [#tpu.dimension_semantics<parallel>], iteration_bounds = array<i64: 1>, scalar_prefetch = 0 : i64, scratch_operands = 0 : i64, tpu.core_type = #tpu.core_type<tc>, window_params = [{transform_indices = @transform_0, window_bounds = array<i64: 64, 32>}, {pipeline_mode = #tpu.pipeline_mode<synchronous>, transform_indices = @transform_1, window_bounds = array<i64: 32, 96>}, {pipeline_mode = #tpu.pipeline_mode<synchronous>, transform_indices = @transform_2, window_bounds = array<i64: 1, 96>}, {transform_indices = @transform_3, window_bounds = array<i64: 64, 96>}]} {
    %c0 = arith.constant 0 : index
    %c0_0 = arith.constant 0 : index
    %0 = vector.load %arg1[%c0, %c0_0] : memref<64x32xbf16, #tpu.memory_space<vmem>>, vector<64x32xbf16>
    %c0_1 = arith.constant 0 : index
    %c0_2 = arith.constant 0 : index
    %1 = vector.load %arg2[%c0_1, %c0_2] : memref<32x96xbf16, #tpu.memory_space<vmem>>, vector<32x96xbf16>
    %cst = arith.constant dense<0.000000e+00> : vector<64x96xf32>
    %2 = tpu.matmul %0, %1, %cst {dimension_numbers = #tpu.dot_dimension_numbers<[1], [0], [0], [1], [0, 0, 1, 1], [], []>} : vector<64x32xbf16>, vector<32x96xbf16>, vector<64x96xf32> -> vector<64x96xf32>
    %c0_3 = arith.constant 0 : index
    %c0_4 = arith.constant 0 : index
    %3 = vector.load %arg3[%c0_3, %c0_4] : memref<1x96xf32, #tpu.memory_space<vmem>>, vector<1x96xf32>
    %4 = vector.broadcast %3 : vector<1x96xf32> to vector<64x96xf32>
    %5 = arith.addf %2, %4 : vector<64x96xf32>
    %c0_5 = arith.constant 0 : index
    %c0_6 = arith.constant 0 : index
    %6 = vector.load %arg4[%c0_5, %c0_6] : memref<64x96xf32, #tpu.memory_space<vmem>>, vector<64x96xf32>
    tpu.vector_store %arg4[%c0_5, %c0_6], %5 {strides = array<i32>} : memref<64x96xf32, #tpu.memory_space<vmem>>, vector<64x96xf32>,
    return
  }
  func.func @transform_0(%arg0: i32) -> (i32, i32) {
    %c0_i32 = arith.constant 0 : i32
    %c0_i32_0 = arith.constant 0 : i32
    return %arg0, %c0_i32 : i32, i32
  }
  func.func @transform_1(%arg0: i32) -> (i32, i32) {
    %c0_i32 = arith.constant 0 : i32
    %c0_i32_0 = arith.constant 0 : i32
    %c0_i32_1 = arith.constant 0 : i32
    return %c0_i32, %c0_i32_0 : i32, i32
  }
  func.func @transform_2(%arg0: i32) -> (i32, i32) {
    %c0_i32 = arith.constant 0 : i32
    %c0_i32_0 = arith.constant 0 : i32
    %c0_i32_1 = arith.constant 0 : i32
    return %c0_i32, %c0_i32_0 : i32, i32
  }
  func.func @transform_3(%arg0: i32) -> (i32, i32) {
    %c0_i32 = arith.constant 0 : i32
    %c0_i32_0 = arith.constant 0 : i32
    return %arg0, %c0_i32 : i32, i32
  }
}

</mosaic_0001>

<llo_original>
// kernel: tpu_custom_call.1
$region0: #{tpu_custom_call.1}
  #allocation0 [shape = 'u32[]', space=smem, size = 0x4, offset = 0x4, fixed_abs, tag = 'smem constant byte address 0x4 - core index']
  #allocation1 [shape = 'u32[72,128]{1,0:T(1,128)}', space=vmem, size = 0x9000, scoped, tag = 'internal scratch']
  %s0 = inlined_call_operand.vmem [shape: bf16[64,32], index: 0, kind: input, shape index: {}]
  %s1 = inlined_call_operand.vmem [shape: bf16[32,96], index: 1, kind: input, shape index: {}]
  %s2 = inlined_call_operand.vmem [shape: f32[1,96], index: 2, kind: input, shape index: {}]
  %s3 = inlined_call_operand.hbm [shape: f32[64,96], index: 3, kind: output, shape index: {}]
  %s4 = sld [smem:[#allocation0]]
  $region22: #{tpu_custom_call.1} parent=0
    _
  %s6 = ssub.s32 1, %s4
  %s7 = scalar_select 0, %s6, %s4
  $region1: #{tpu_custom_call.1} parent=0
    #allocation2 [shape = 'u8[32768]{0}', space=vmem, size = 0x8000, scoped, tag = 'output window, operand 0, single buffered']
    #allocation3 [shape = 's32[1]{0}', space=sflag, size = 0x4, scoped, tag = 'scoped memory for tpu_custom_call.1']
    %8 = vsyncpa [#allocation3], 0
    // Predicated region
    $region2: #{tpu_custom_call.1} parent=1 // pred_check
      _
    $region3: #{tpu_custom_call.1} parent=1 // pred_check_branch
      %10 = sbr.rel (0) target = $region5
    $region4: #{tpu_custom_call.1} parent=1 // pred_region
      _
    $region5: #{tpu_custom_call.1} parent=1 // pred_fallthru
      _
    // Predicated region
    $region6: #{tpu_custom_call.1} parent=1 // pred_check
      _
    $region7: #{tpu_custom_call.1} parent=1 // pred_check_branch
      %12 = sbr.rel (0) target = $region9
    $region8: #{tpu_custom_call.1} parent=1 // pred_region
      _
    $region9: #{tpu_custom_call.1} parent=1 // pred_fallthru
      _
    // Predicated region
    $region10: #{tpu_custom_call.1} parent=1 // pred_check
      _
    $region11: #{tpu_custom_call.1} parent=1 // pred_check_branch
      %14 = sbr.rel (0) target = $region13
    $region12: #{tpu_custom_call.1} parent=1 // pred_region
      _
    $region13: #{tpu_custom_call.1} parent=1 // pred_fallthru
      _
    %v16 = vld [vmem:[%s0] sm:$0xf]
    %v17 = vld [vmem:[%s0 + $0x4] sm:$0xf]
    %v18 = vld [vmem:[%s0 + $0x8] sm:$0xf]
    %v19 = vld [vmem:[%s0 + $0xc] sm:$0xf]
    %v20 = vld [vmem:[%s0 + $0x10] sm:$0xf]
    %v21 = vld [vmem:[%s0 + $0x14] sm:$0xf]
    %v22 = vld [vmem:[%s0 + $0x18] sm:$0xf]
    %v23 = vld [vmem:[%s0 + $0x1c] sm:$0xf]
    %v24 = vld [vmem:[%s1] sm:$0xf]
    %v25 = vld [vmem:[%s1 + $0x4] sm:$0xf]
    %v26 = vld [vmem:[%s1 + $0x8] sm:$0xf]
    %v27 = vld [vmem:[%s1 + $0xc] sm:$0xf]
    %v28 = vld [vmem:[%s2] sm:$0x1]
    %v30 = vperm.slane %v28, 0
    %v40 = vunpack.c.l.b16 %v16
    %v41 = vunpack.c.l.b16 %v17
    %v42 = vunpack.c.l.b16 %v18
    %v43 = vunpack.c.l.b16 %v19
    %v44 = vunpack.c.l.b16 %v20
    %v45 = vunpack.c.l.b16 %v21
    %v46 = vunpack.c.l.b16 %v22
    %v47 = vunpack.c.l.b16 %v23
    %v48 = vpack.c.b16 %v41, %v40
    %v49 = vpack.c.b16 %v43, %v42
    %v50 = vpack.c.b16 %v45, %v44
    %v51 = vpack.c.b16 %v47, %v46
    %v56 = vunpack.c.l.b16 %v24
    %v57 = vunpack.c.l.b16 %v25
    %v58 = vunpack.c.l.b16 %v26
    %v59 = vunpack.c.l.b16 %v27
    %v60 = vpack.c.b16 %v57, %v56
    %v61 = vpack.c.b16 %v59, %v58
    %vm64 = vcmask 261120
    %v66 = vsel %vm64, %v48, 0
    %v69 = vsel %vm64, %v49, 0
    %v72 = vsel %vm64, %v50, 0
    %v75 = vsel %vm64, %v51, 0
    %77 = vmatpush.bf16.msra.mxu0 0
    %78 = vmatpush.bf16.msra.mxu0 0
    %79 = vmatpush.bf16.msra.mxu0 0
    %80 = vmatpush.bf16.msra.mxu0 0
    %81 = vmatpush.bf16.msra.mxu0 0
    %82 = vmatpush.bf16.msra.mxu0 0
    %83 = vmatpush.bf16.msra.mxu0 %v61
    %84 = vmatpush.bf16.msra.mxu0 %v60
    %85 = vmatmul.bf16.gmra.mxu0 %v66
    %v86 = vpop.f32.mrf.mxu0
    %v87 = vadd.f32 %v30, %v86
    %v88 = vpop.f32.mrf.mxu0
    %v89 = vadd.f32 %v30, %v88
    %90 = vmatmul.bf16.gmra.mxu0 %v69
    %v91 = vpop.f32.mrf.mxu0
    %v92 = vadd.f32 %v30, %v91
    %v93 = vpop.f32.mrf.mxu0
    %v94 = vadd.f32 %v30, %v93
    %95 = vmatmul.bf16.gmra.mxu0 %v72
    %v96 = vpop.f32.mrf.mxu0
    %v97 = vadd.f32 %v30, %v96
    %v98 = vpop.f32.mrf.mxu0
    %v99 = vadd.f32 %v30, %v98
    %100 = vmatmul.bf16.gmra.mxu0 %v75
    %v101 = vpop.f32.mrf.mxu0
    %v102 = vadd.f32 %v30, %v101
    %v103 = vpop.f32.mrf.mxu0
    %v104 = vadd.f32 %v30, %v103
    %105 = vdwg.mxu0
    %vm106 = vcmask 785408
    %107 = vst.msk [vmem:[#allocation2] sm:$0xff] %vm106, %v87
    %108 = vst.msk [vmem:[#allocation2 + $0x8] sm:$0xff] %vm106, %v89
    %109 = vst.msk [vmem:[#allocation2 + $0x10] sm:$0xff] %vm106, %v92
    %110 = vst.msk [vmem:[#allocation2 + $0x18] sm:$0xff] %vm106, %v94
    %111 = vst.msk [vmem:[#allocation2 + $0x20] sm:$0xff] %vm106, %v97
    %112 = vst.msk [vmem:[#allocation2 + $0x28] sm:$0xff] %vm106, %v99
    %113 = vst.msk [vmem:[#allocation2 + $0x30] sm:$0xff] %vm106, %v102
    %114 = vst.msk [vmem:[#allocation2 + $0x38] sm:$0xff] %vm106, %v104
    // Predicated region
    $region14: #{tpu_custom_call.1} parent=1 // pred_check
      _
    $region15: #{tpu_custom_call.1} parent=1 // pred_check_branch
      %116 = sbr.rel (0) target = $region17
    $region16: #{tpu_custom_call.1} parent=1 // pred_region
      %118 = vsyncadd [#allocation3], 0
      %s119 = sshll.u32 [#allocation2], 4
      %s120 = int_to_ptr.vmem [resolvable:$true] %s119
      %s121 = sshll.u32 %s3, 4
      %s122 = int_to_ptr.hbm [resolvable:$true] %s121
      %127 = dma.vmem_to_hbm [thread:$0]  %s120, 1024, %s122, [#allocation3], 128, 128, 8
    $region17: #{tpu_custom_call.1} parent=1 // pred_fallthru
      _
    // Predicated region
    $region18: #{tpu_custom_call.1} parent=1 // pred_check
      _
    $region19: #{tpu_custom_call.1} parent=1 // pred_check_branch
      %129 = sbr.rel (0) target = $region21
    $region20: #{tpu_custom_call.1} parent=1 // pred_region
      %131 = dma.done [#allocation3], 1024
    $region21: #{tpu_custom_call.1} parent=1 // pred_fallthru
      _
    %132 = vsyncpa [#allocation3], 1

// kernel: tpu_custom_call.1
$region0: #{tpu_custom_call.1}
  #allocation0 [shape = 'u32[]', space=smem, size = 0x4, offset = 0x4, fixed_abs, tag = 'smem constant byte address 0x4 - core index']
  #allocation1 [shape = 'u32[72,128]{1,0:T(1,128)}', space=vmem, size = 0x9000, scoped, tag = 'internal scratch']
  %s0 = inlined_call_operand.vmem [shape: bf16[64,32], index: 0, kind: input, shape index: {}]
  %s1 = inlined_call_operand.vmem [shape: bf16[32,96], index: 1, kind: input, shape index: {}]
  %s2 = inlined_call_operand.vmem [shape: f32[1,96], index: 2, kind: input, shape index: {}]
  %s3 = inlined_call_operand.hbm [shape: f32[64,96], index: 3, kind: output, shape index: {}]
  %s4 = sld [smem:[#allocation0]]
  $region22: #{tpu_custom_call.1} parent=0
    _
  %s6 = ssub.s32 1, %s4
  %s7 = scalar_select 0, %s6, %s4
  $region1: #{tpu_custom_call.1} parent=0
    #allocation2 [shape = 'u8[32768]{0}', space=vmem, size = 0x8000, scoped, tag = 'output window, operand 0, single buffered']
    #allocation3 [shape = 's32[1]{0}', space=sflag, size = 0x4, scoped, tag = 'scoped memory for tpu_custom_call.1']
    %8 = vsyncpa [#allocation3], 0
    // Predicated region
    $region2: #{tpu_custom_call.1} parent=1 // pred_check
      _
    $region3: #{tpu_custom_call.1} parent=1 // pred_check_branch
      %10 = sbr.rel (0) target = $region5
    $region4: #{tpu_custom_call.1} parent=1 // pred_region
      _
    $region5: #{tpu_custom_call.1} parent=1 // pred_fallthru
      _
    // Predicated region
    $region6: #{tpu_custom_call.1} parent=1 // pred_check
      _
    $region7: #{tpu_custom_call.1} parent=1 // pred_check_branch
      %12 = sbr.rel (0) target = $region9
    $region8: #{tpu_custom_call.1} parent=1 // pred_region
      _
    $region9: #{tpu_custom_call.1} parent=1 // pred_fallthru
      _
    // Predicated region
    $region10: #{tpu_custom_call.1} parent=1 // pred_check
      _
    $region11: #{tpu_custom_call.1} parent=1 // pred_check_branch
      %14 = sbr.rel (0) target = $region13
    $region12: #{tpu_custom_call.1} parent=1 // pred_region
      _
    $region13: #{tpu_custom_call.1} parent=1 // pred_fallthru
      _
    %v16 = vld [vmem:[%s0] sm:$0xf]
    %v17 = vld [vmem:[%s0 + $0x4] sm:$0xf]
    %v18 = vld [vmem:[%s0 + $0x8] sm:$0xf]
    %v19 = vld [vmem:[%s0 + $0xc] sm:$0xf]
    %v20 = vld [vmem:[%s0 + $0x10] sm:$0xf]
    %v21 = vld [vmem:[%s0 + $0x14] sm:$0xf]
    %v22 = vld [vmem:[%s0 + $0x18] sm:$0xf]
    %v23 = vld [vmem:[%s0 + $0x1c] sm:$0xf]
    %v24 = vld [vmem:[%s1] sm:$0xf]
    %v25 = vld [vmem:[%s1 + $0x4] sm:$0xf]
    %v26 = vld [vmem:[%s1 + $0x8] sm:$0xf]
    %v27 = vld [vmem:[%s1 + $0xc] sm:$0xf]
    %v28 = vld [vmem:[%s2] sm:$0x1]
    %v30 = vperm.slane %v28, 0
    %v40 = vunpack.c.l.b16 %v16
    %v41 = vunpack.c.l.b16 %v17
    %v42 = vunpack.c.l.b16 %v18
    %v43 = vunpack.c.l.b16 %v19
    %v44 = vunpack.c.l.b16 %v20
    %v45 = vunpack.c.l.b16 %v21
    %v46 = vunpack.c.l.b16 %v22
    %v47 = vunpack.c.l.b16 %v23
    %v48 = vpack.c.b16 %v41, %v40
    %v49 = vpack.c.b16 %v43, %v42
    %v50 = vpack.c.b16 %v45, %v44
    %v51 = vpack.c.b16 %v47, %v46
    %v56 = vunpack.c.l.b16 %v24
    %v57 = vunpack.c.l.b16 %v25
    %v58 = vunpack.c.l.b16 %v26
    %v59 = vunpack.c.l.b16 %v27
    %v60 = vpack.c.b16 %v57, %v56
    %v61 = vpack.c.b16 %v59, %v58
    %vm64 = vcmask 261120
    %v66 = vsel %vm64, %v48, 0
    %v69 = vsel %vm64, %v49, 0
    %v72 = vsel %vm64, %v50, 0
    %v75 = vsel %vm64, %v51, 0
    %77 = vmatpush.bf16.msra.mxu0 0
    %78 = vmatpush.bf16.msra.mxu0 0
    %79 = vmatpush.bf16.msra.mxu0 0
    %80 = vmatpush.bf16.msra.mxu0 0
    %81 = vmatpush.bf16.msra.mxu0 0
    %82 = vmatpush.bf16.msra.mxu0 0
    %83 = vmatpush.bf16.msra.mxu0 %v61
    %84 = vmatpush.bf16.msra.mxu0 %v60
    %85 = vmatmul.bf16.gmra.mxu0 %v66
    %v86 = vpop.f32.mrf.mxu0
    %v87 = vadd.f32 %v30, %v86
    %v88 = vpop.f32.mrf.mxu0
    %v89 = vadd.f32 %v30, %v88
    %90 = vmatmul.bf16.gmra.mxu0 %v69
    %v91 = vpop.f32.mrf.mxu0
    %v92 = vadd.f32 %v30, %v91
    %v93 = vpop.f32.mrf.mxu0
    %v94 = vadd.f32 %v30, %v93
    %95 = vmatmul.bf16.gmra.mxu0 %v72
    %v96 = vpop.f32.mrf.mxu0
    %v97 = vadd.f32 %v30, %v96
    %v98 = vpop.f32.mrf.mxu0
    %v99 = vadd.f32 %v30, %v98
    %100 = vmatmul.bf16.gmra.mxu0 %v75
    %v101 = vpop.f32.mrf.mxu0
    %v102 = vadd.f32 %v30, %v101
    %v103 = vpop.f32.mrf.mxu0
    %v104 = vadd.f32 %v30, %v103
    %105 = vdwg.mxu0
    %vm106 = vcmask 785408
    %107 = vst.msk [vmem:[#allocation2] sm:$0xff] %vm106, %v87
    %108 = vst.msk [vmem:[#allocation2 + $0x8] sm:$0xff] %vm106, %v89
    %109 = vst.msk [vmem:[#allocation2 + $0x10] sm:$0xff] %vm106, %v92
    %110 = vst.msk [vmem:[#allocation2 + $0x18] sm:$0xff] %vm106, %v94
    %111 = vst.msk [vmem:[#allocation2 + $0x20] sm:$0xff] %vm106, %v97
    %112 = vst.msk [vmem:[#allocation2 + $0x28] sm:$0xff] %vm106, %v99
    %113 = vst.msk [vmem:[#allocation2 + $0x30] sm:$0xff] %vm106, %v102
    %114 = vst.msk [vmem:[#allocation2 + $0x38] sm:$0xff] %vm106, %v104
    // Predicated region
    $region14: #{tpu_custom_call.1} parent=1 // pred_check
      _
    $region15: #{tpu_custom_call.1} parent=1 // pred_check_branch
      %116 = sbr.rel (0) target = $region17
    $region16: #{tpu_custom_call.1} parent=1 // pred_region
      %118 = vsyncadd [#allocation3], 0
      %s119 = sshll.u32 [#allocation2], 4
      %s120 = int_to_ptr.vmem [resolvable:$true] %s119
      %s121 = sshll.u32 %s3, 4
      %s122 = int_to_ptr.hbm [resolvable:$true] %s121
      %127 = dma.vmem_to_hbm [thread:$0]  %s120, 1024, %s122, [#allocation3], 128, 128, 8
    $region17: #{tpu_custom_call.1} parent=1 // pred_fallthru
      _
    // Predicated region
    $region18: #{tpu_custom_call.1} parent=1 // pred_check
      _
    $region19: #{tpu_custom_call.1} parent=1 // pred_check_branch
      %129 = sbr.rel (0) target = $region21
    $region20: #{tpu_custom_call.1} parent=1 // pred_region
      %131 = dma.done [#allocation3], 1024
    $region21: #{tpu_custom_call.1} parent=1 // pred_fallthru
      _
    %132 = vsyncpa [#allocation3], 1

</llo_original>
